<compile_context>
chip_gen: v7x
topology: tpu7x:2x2x1
jax: 0.10.0
libtpu: 0.0.40
codegen_flags: <defaults>
</compile_context>

<pallas_src>
import jax
import jax.numpy as jnp
from jax import lax
from jax.experimental import pallas as pl
from jax.experimental.pallas import tpu as pltpu

IN_FEATURES = 25
HIDDEN = 10
CLASSES = 2


def _round_up(n, m):
    return ((n + m - 1) // m) * m


def net_kernel(x_ref, w1_ref, b1_ref, w2_ref, b2_ref, oT_ref):
    """One batch tile.

    x_ref  : [TB, 25]  batch-major block of the caller's x (no wrapper transpose)
    w1_ref : [10, 25]  b1_ref : [10, 1]    (resident across the grid)
    w2_ref : [2, 10]   b2_ref : [2, 1]
    oT_ref : [2, TB]   lane-dense, class-major log-probabilities
    """
    # Hidden layer as an NT matmul on the MXU: W1 @ x_blk^T -> [10, TB].
    # Folding the transpose into the dot keeps batch on the lane axis without
    # a separate XLA transpose pass over x.
    h = lax.dot_general(
        w1_ref[...], x_ref[...],
        dimension_numbers=(((1,), (1,)), ((), ())),
        preferred_element_type=jnp.float32,
    )
    h = jnp.tanh(h + b1_ref[...])                          # f32 bias + EUP tanh

    # Output layer: [2, 10] @ [10, TB] -> [2, TB]  (f32)
    logits = jnp.dot(w2_ref[...], h, preferred_element_type=jnp.float32)
    logits = logits + b2_ref[...]

    # 2-class log_softmax along the sublane (class) axis via a stable
    # softplus form: purely elementwise (no XLU reductions), written with two
    # direct row stores instead of a concatenate.
    l0 = logits[0:1, :]
    l1 = logits[1:2, :]
    d = l0 - l1
    t = jnp.log(1.0 + jnp.exp(-jnp.abs(d)))                # shared transcendental
    oT_ref[0:1, :] = -(jnp.maximum(-d, 0.0) + t)           # log p(class 0)
    oT_ref[1:2, :] = -(jnp.maximum(d, 0.0) + t)            # log p(class 1)


def net_forward(x, w1, b1, w2, b2, *, block_b=16384, class_major_output=False):
    """Forward pass of `Net`.

    x  : [B, 25]  float32 or bfloat16 (bf16 halves the dominant HBM traffic)
    w1 : [10, 25], b1 : [10, 1], w2 : [2, 10], b2 : [2, 1]  (nn.Linear layout)
    Returns float32 log-probabilities, [B, 2] (or [2, B] if class_major_output).
    """
    B = int(x.shape[0])
    assert x.shape[1] == IN_FEATURES

    # Match W1's dtype to x so the dominant dot takes the fast MXU path; the
    # tiny resident weight cast is free.  Second layer / softmax stay f32.
    w1c = w1.astype(x.dtype)
    b1c = b1.astype(jnp.float32)
    w2c = w2.astype(jnp.float32)
    b2c = b2.astype(jnp.float32)

    # Batch tile: lane-dense multiple of 128, capped at block_b, and split so
    # large batches give >= 2 grid steps (lets v7x's two TensorCores share the
    # "parallel" grid axis).  Small batches use one exact-size tile so no
    # padding or ragged blocks are needed at all.
    b_aligned = _round_up(B, 128)
    half = _round_up((b_aligned + 1) // 2, 128)
    TB = max(128, min(int(block_b), half))
    if B <= TB:
        TB = B
    grid = (pl.cdiv(B, TB),)          # ragged final block handled by Pallas

    # Explicit VMEM budget: the double-buffered x tile is lane-padded 25->128
    # in VMEM.  Keeps large tiles safe on v5e's 16 MiB scoped default and well
    # under v7x's 64 MiB physical VMEM.
    x_tile_bytes = _round_up(TB, 8) * 128 * x.dtype.itemsize
    out_tile_bytes = 8 * _round_up(TB, 128) * 4
    vmem_limit = int(min(48 << 20,
                         max(16 << 20,
                             2 * (x_tile_bytes + out_tile_bytes) + (4 << 20))))

    cost = pl.CostEstimate(
        flops=2 * B * (IN_FEATURES * HIDDEN + HIDDEN * CLASSES) + 8 * B,
        transcendentals=12 * B,                        # 10x tanh + exp + log
        bytes_accessed=(x.size * x.dtype.itemsize + 4 * CLASSES * B
                        + 4 * (w1.size + b1.size + w2.size + b2.size)),
    )

    outT = pl.pallas_call(
        net_kernel,
        out_shape=jax.ShapeDtypeStruct((CLASSES, B), jnp.float32),
        grid=grid,
        in_specs=[
            # x: contiguous [TB, 25] row blocks of the original array; the
            # transpose lives inside the kernel's NT matmul.
            # TODO(synk): if profiling on v7x shows exposed DMA at large TB,
            # bump this spec to pipeline_mode=pl.Buffered(3).
            pl.BlockSpec((TB, IN_FEATURES), lambda i: (i, 0)),
            # Weights/biases: constant index maps -> fetched once, resident.
            pl.BlockSpec((HIDDEN, IN_FEATURES), lambda i: (0, 0)),
            pl.BlockSpec((HIDDEN, 1), lambda i: (0, 0)),
            pl.BlockSpec((CLASSES, HIDDEN), lambda i: (0, 0)),
            pl.BlockSpec((CLASSES, 1), lambda i: (0, 0)),
        ],
        out_specs=pl.BlockSpec((CLASSES, TB), lambda i: (0, i)),  # lane-dense
        compiler_params=pltpu.CompilerParams(
            dimension_semantics=("parallel",),         # megacore sharding on v7x
            vmem_limit_bytes=vmem_limit,
        ),
        cost_estimate=cost,
    )(x, w1c, b1c, w2c, b2c)

    if class_major_output:
        return outT                      # [2, B]: no trailing transpose copy
    return jnp.transpose(outT)           # [B, 2] to match PyTorch semantics


def init_params(key):
    """PyTorch nn.Linear layout/init: W [out, in] ~ U(-1/sqrt(fan_in), ...)."""
    k1, k2, k3, k4 = jax.random.split(key, 4)
    bound1 = 1.0 / jnp.sqrt(25.0)
    bound2 = 1.0 / jnp.sqrt(10.0)
    w1 = jax.random.uniform(k1, (HIDDEN, IN_FEATURES), jnp.float32, -bound1, bound1)
    b1 = jax.random.uniform(k2, (HIDDEN, 1), jnp.float32, -bound1, bound1)
    w2 = jax.random.uniform(k3, (CLASSES, HIDDEN), jnp.float32, -bound2, bound2)
    b2 = jax.random.uniform(k4, (CLASSES, 1), jnp.float32, -bound2, bound2)
    return w1, b1, w2, b2


def net_forward_ref(x, w1, b1, w2, b2):
    """Pure-JAX (XLA) reference with PyTorch semantics, for correctness checks."""
    h = jnp.tanh(jnp.dot(x, w1.T, precision=jax.lax.Precision.HIGHEST) + b1.T)
    logits = jnp.dot(h, w2.T, precision=jax.lax.Precision.HIGHEST) + b2.T
    return jax.nn.log_softmax(logits, axis=-1)


if __name__ == "__main__":
    key = jax.random.PRNGKey(0)
    kx, kp, kx2 = jax.random.split(key, 3)
    w1, b1, w2, b2 = init_params(kp)

    # 1) Small batch, f32, single exact-size tile (no padding, no raggedness).
    x = jax.random.normal(kx, (8, IN_FEATURES), jnp.float32)
    out = jax.block_until_ready(net_forward(x, w1, b1, w2, b2))
    ref = net_forward_ref(x, w1, b1, w2, b2)
    assert out.shape == (8, CLASSES)
    assert bool(jnp.all(jnp.isfinite(out)))
    assert jnp.allclose(out, ref, atol=2e-2, rtol=2e-2)

    # 2) Multi-tile grid with a ragged final block (exercises the pipelined
    #    grid and the >=2-step split used for v7x megacore).
    x2 = jax.random.normal(kx2, (300, IN_FEATURES), jnp.float32)
    out2 = jax.block_until_ready(net_forward(x2, w1, b1, w2, b2, block_b=256))
    ref2 = net_forward_ref(x2, w1, b1, w2, b2)
    assert out2.shape == (300, CLASSES)
    assert jnp.allclose(out2, ref2, atol=2e-2, rtol=2e-2)

    # 3) bf16 activations: halves the dominant HBM traffic, MXU accumulates in
    #    f32.  Looser tolerance for the input quantization.
    x2b = x2.astype(jnp.bfloat16)
    out3 = jax.block_until_ready(net_forward(x2b, w1, b1, w2, b2, block_b=256))
    ref3 = net_forward_ref(x2b.astype(jnp.float32), w1, b1, w2, b2)
    assert out3.dtype == jnp.float32
    assert jnp.allclose(out3, ref3, atol=5e-2, rtol=5e-2)

    # 4) Class-major output path (drops the trailing transpose copy).
    out4 = jax.block_until_ready(
        net_forward(x, w1, b1, w2, b2, class_major_output=True))
    assert out4.shape == (CLASSES, 8)
    assert jnp.allclose(out4.T, ref, atol=2e-2, rtol=2e-2)

    print("KERNEL_OK")
</pallas_src>

<mosaic_0001>
module attributes {stable_mosaic.version = 11 : i64} {
  func.func @net_kernel(%arg0: i32, %arg1: memref<8x25xf32, #tpu.memory_space<vmem>>, %arg2: memref<10x25xf32, #tpu.memory_space<vmem>>, %arg3: memref<10x1xf32, #tpu.memory_space<vmem>>, %arg4: memref<2x10xf32, #tpu.memory_space<vmem>>, %arg5: memref<2x1xf32, #tpu.memory_space<vmem>>, %arg6: memref<2x8xf32, #tpu.memory_space<vmem>>) attributes {dimension_semantics = [#tpu.dimension_semantics<parallel>], iteration_bounds = array<i64: 1>, scalar_prefetch = 0 : i64, scratch_operands = 0 : i64, tpu.core_type = #tpu.core_type<tc>, window_params = [{transform_indices = @transform_0, window_bounds = array<i64: 8, 25>}, {pipeline_mode = #tpu.pipeline_mode<synchronous>, transform_indices = @transform_1, window_bounds = array<i64: 10, 25>}, {pipeline_mode = #tpu.pipeline_mode<synchronous>, transform_indices = @transform_2, window_bounds = array<i64: 10, 1>}, {pipeline_mode = #tpu.pipeline_mode<synchronous>, transform_indices = @transform_3, window_bounds = array<i64: 2, 10>}, {pipeline_mode = #tpu.pipeline_mode<synchronous>, transform_indices = @transform_4, window_bounds = array<i64: 2, 1>}, {transform_indices = @transform_5, window_bounds = array<i64: 2, 8>}]} {
    %c0 = arith.constant 0 : index
    %c0_0 = arith.constant 0 : index
    %0 = vector.load %arg2[%c0, %c0_0] : memref<10x25xf32, #tpu.memory_space<vmem>>, vector<10x25xf32>
    %c0_1 = arith.constant 0 : index
    %c0_2 = arith.constant 0 : index
    %1 = vector.load %arg1[%c0_1, %c0_2] : memref<8x25xf32, #tpu.memory_space<vmem>>, vector<8x25xf32>
    %cst = arith.constant dense<0.000000e+00> : vector<10x8xf32>
    %2 = tpu.matmul %0, %1, %cst {dimension_numbers = #tpu.dot_dimension_numbers<[1], [1], [0], [0], [0, 0, 1, 0], [], []>} : vector<10x25xf32>, vector<8x25xf32>, vector<10x8xf32> -> vector<10x8xf32>
    %c0_3 = arith.constant 0 : index
    %c0_4 = arith.constant 0 : index
    %3 = vector.load %arg3[%c0_3, %c0_4] : memref<10x1xf32, #tpu.memory_space<vmem>>, vector<10x1xf32>
    %4 = vector.broadcast %3 : vector<10x1xf32> to vector<10x8xf32>
    %5 = arith.addf %2, %4 : vector<10x8xf32>
    %6 = math.tanh %5 : vector<10x8xf32>
    %c0_5 = arith.constant 0 : index
    %c0_6 = arith.constant 0 : index
    %7 = vector.load %arg4[%c0_5, %c0_6] : memref<2x10xf32, #tpu.memory_space<vmem>>, vector<2x10xf32>
    %cst_7 = arith.constant dense<0.000000e+00> : vector<2x8xf32>
    %8 = tpu.matmul %7, %6, %cst_7 {dimension_numbers = #tpu.dot_dimension_numbers<[1], [0], [0], [1], [0, 0, 1, 1], [], []>} : vector<2x10xf32>, vector<10x8xf32>, vector<2x8xf32> -> vector<2x8xf32>
    %c0_8 = arith.constant 0 : index
    %c0_9 = arith.constant 0 : index
    %9 = vector.load %arg5[%c0_8, %c0_9] : memref<2x1xf32, #tpu.memory_space<vmem>>, vector<2x1xf32>
    %10 = vector.broadcast %9 : vector<2x1xf32> to vector<2x8xf32>
    %11 = arith.addf %8, %10 : vector<2x8xf32>
    %12 = vector.extract_strided_slice %11 {offsets = [0, 0], sizes = [1, 8], strides = [1, 1]} : vector<2x8xf32> to vector<1x8xf32>
    %13 = vector.extract_strided_slice %11 {offsets = [1, 0], sizes = [1, 8], strides = [1, 1]} : vector<2x8xf32> to vector<1x8xf32>
    %14 = arith.subf %12, %13 : vector<1x8xf32>
    %15 = math.absf %14 : vector<1x8xf32>
    %cst_10 = arith.constant 0.000000e+00 : f32
    %16 = vector.broadcast %cst_10 : f32 to vector<1x8xf32>
    %17 = arith.subf %16, %15 : vector<1x8xf32>
    %18 = math.exp %17 : vector<1x8xf32>
    %cst_11 = arith.constant 1.000000e+00 : f32
    %19 = vector.broadcast %cst_11 : f32 to vector<1x8xf32>
    %20 = arith.addf %19, %18 : vector<1x8xf32>
    %21 = math.log %20 : vector<1x8xf32>
    %cst_12 = arith.constant 0.000000e+00 : f32
    %22 = vector.broadcast %cst_12 : f32 to vector<1x8xf32>
    %23 = arith.subf %22, %14 : vector<1x8xf32>
    %cst_13 = arith.constant 0.000000e+00 : f32
    %24 = vector.broadcast %cst_13 : f32 to vector<1x8xf32>
    %25 = arith.maximumf %23, %24 : vector<1x8xf32>
    %26 = arith.addf %25, %21 : vector<1x8xf32>
    %cst_14 = arith.constant 0.000000e+00 : f32
    %27 = vector.broadcast %cst_14 : f32 to vector<1x8xf32>
    %28 = arith.subf %27, %26 : vector<1x8xf32>
    %c0_15 = arith.constant 0 : index
    %c0_16 = arith.constant 0 : index
    %29 = vector.load %arg6[%c0_15, %c0_16] : memref<2x8xf32, #tpu.memory_space<vmem>>, vector<1x8xf32>
    tpu.vector_store %arg6[%c0_15, %c0_16], %28 {strides = array<i32>} : memref<2x8xf32, #tpu.memory_space<vmem>>, vector<1x8xf32>,
    %cst_17 = arith.constant 0.000000e+00 : f32
    %30 = vector.broadcast %cst_17 : f32 to vector<1x8xf32>
    %31 = arith.maximumf %14, %30 : vector<1x8xf32>
    %32 = arith.addf %31, %21 : vector<1x8xf32>
    %cst_18 = arith.constant 0.000000e+00 : f32
    %33 = vector.broadcast %cst_18 : f32 to vector<1x8xf32>
    %34 = arith.subf %33, %32 : vector<1x8xf32>
    %c1 = arith.constant 1 : index
    %c0_19 = arith.constant 0 : index
    %35 = vector.load %arg6[%c1, %c0_19] : memref<2x8xf32, #tpu.memory_space<vmem>>, vector<1x8xf32>
    tpu.vector_store %arg6[%c1, %c0_19], %34 {strides = array<i32>} : memref<2x8xf32, #tpu.memory_space<vmem>>, vector<1x8xf32>,
    return
  }
  func.func @transform_0(%arg0: i32) -> (i32, i32) {
    %c0_i32 = arith.constant 0 : i32
    %c0_i32_0 = arith.constant 0 : i32
    return %arg0, %c0_i32 : i32, i32
  }
  func.func @transform_1(%arg0: i32) -> (i32, i32) {
    %c0_i32 = arith.constant 0 : i32
    %c0_i32_0 = arith.constant 0 : i32
    %c0_i32_1 = arith.constant 0 : i32
    return %c0_i32, %c0_i32_0 : i32, i32
  }
  func.func @transform_2(%arg0: i32) -> (i32, i32) {
    %c0_i32 = arith.constant 0 : i32
    %c0_i32_0 = arith.constant 0 : i32
    %c0_i32_1 = arith.constant 0 : i32
    return %c0_i32, %c0_i32_0 : i32, i32
  }
  func.func @transform_3(%arg0: i32) -> (i32, i32) {
    %c0_i32 = arith.constant 0 : i32
    %c0_i32_0 = arith.constant 0 : i32
    %c0_i32_1 = arith.constant 0 : i32
    return %c0_i32, %c0_i32_0 : i32, i32
  }
  func.func @transform_4(%arg0: i32) -> (i32, i32) {
    %c0_i32 = arith.constant 0 : i32
    %c0_i32_0 = arith.constant 0 : i32
    %c0_i32_1 = arith.constant 0 : i32
    return %c0_i32, %c0_i32_0 : i32, i32
  }
  func.func @transform_5(%arg0: i32) -> (i32, i32) {
    %c0_i32 = arith.constant 0 : i32
    %c0_i32_0 = arith.constant 0 : i32
    return %c0_i32, %arg0 : i32, i32
  }
}

</mosaic_0001>

<llo_original>
// kernel: tpu_custom_call.1
$region0: #{tpu_custom_call.1}
  #allocation0 [shape = 'u32[]', space=smem, size = 0x4, offset = 0x4, fixed_abs, tag = 'smem constant byte address 0x4 - core index']
  #allocation1 [shape = 'u32[144,128]{1,0:T(1,128)}', space=vmem, size = 0x12000, scoped, tag = 'internal scratch']
  %s0 = inlined_call_operand.vmem [shape: f32[8,25], index: 0, kind: input, shape index: {}]
  %s1 = inlined_call_operand.vmem [shape: f32[10,25], index: 1, kind: input, shape index: {}]
  %s2 = inlined_call_operand.vmem [shape: f32[10,1], index: 2, kind: input, shape index: {}]
  %s3 = inlined_call_operand.vmem [shape: f32[2,10], index: 3, kind: input, shape index: {}]
  %s4 = inlined_call_operand.vmem [shape: f32[2,1], index: 4, kind: input, shape index: {}]
  %s5 = inlined_call_operand.hbm [shape: f32[2,8], index: 5, kind: output, shape index: {}]
  %s6 = sld [smem:[#allocation0]]
  $region30: #{tpu_custom_call.1} parent=0
    _
  %s8 = ssub.s32 1, %s6
  %s9 = scalar_select 0, %s8, %s6
  $region1: #{tpu_custom_call.1} parent=0
    #allocation2 [shape = 'u8[1024]{0}', space=vmem, size = 0x400, scoped, tag = 'output window, operand 0, single buffered']
    #allocation3 [shape = 's32[1]{0}', space=sflag, size = 0x4, scoped, tag = 'scoped memory for tpu_custom_call.1']
    %10 = vsyncpa [#allocation3], 0
    // Predicated region
    $region2: #{tpu_custom_call.1} parent=1 // pred_check
      _
    $region3: #{tpu_custom_call.1} parent=1 // pred_check_branch
      %12 = sbr.rel (0) target = $region5
    $region4: #{tpu_custom_call.1} parent=1 // pred_region
      _
    $region5: #{tpu_custom_call.1} parent=1 // pred_fallthru
      _
    // Predicated region
    $region6: #{tpu_custom_call.1} parent=1 // pred_check
      _
    $region7: #{tpu_custom_call.1} parent=1 // pred_check_branch
      %14 = sbr.rel (0) target = $region9
    $region8: #{tpu_custom_call.1} parent=1 // pred_region
      _
    $region9: #{tpu_custom_call.1} parent=1 // pred_fallthru
      _
    // Predicated region
    $region10: #{tpu_custom_call.1} parent=1 // pred_check
      _
    $region11: #{tpu_custom_call.1} parent=1 // pred_check_branch
      %16 = sbr.rel (0) target = $region13
    $region12: #{tpu_custom_call.1} parent=1 // pred_region
      _
    $region13: #{tpu_custom_call.1} parent=1 // pred_fallthru
      _
    // Predicated region
    $region14: #{tpu_custom_call.1} parent=1 // pred_check
      _
    $region15: #{tpu_custom_call.1} parent=1 // pred_check_branch
      %18 = sbr.rel (0) target = $region17
    $region16: #{tpu_custom_call.1} parent=1 // pred_region
      _
    $region17: #{tpu_custom_call.1} parent=1 // pred_fallthru
      _
    // Predicated region
    $region18: #{tpu_custom_call.1} parent=1 // pred_check
      _
    $region19: #{tpu_custom_call.1} parent=1 // pred_check_branch
      %20 = sbr.rel (0) target = $region21
    $region20: #{tpu_custom_call.1} parent=1 // pred_region
      _
    $region21: #{tpu_custom_call.1} parent=1 // pred_fallthru
      _
    %v21 = vld [vmem:[%s1] sm:$0xff]
    %v22 = vld [vmem:[%s1 + $0x8] sm:$0x3]
    %v23 = vld [vmem:[%s0] sm:$0xff]
    %v24 = vld [vmem:[%s2] sm:$0xff]
    %v25 = vld [vmem:[%s2 + $0x8] sm:$0x3]
    %27 = vset.pattern.permute.xlu0 0
    %28 = vperm.xlu0 %27, %v24
    %v29 = vpop.permute.xlu0 %28
    %32 = vset.pattern.permute.xlu0 0
    %33 = vperm.xlu0 %32, %v25
    %v34 = vpop.permute.xlu0 %33
    %vm36 = vcmask 203776
    %v38 = vsel %vm36, %v21, 0
    %v41 = vsel %vm36, %v22, 0
    %v44 = vsel %vm36, %v23, 0
    %46 = vmatprep.subr.mxu0 0.0
    %47 = vmatpush1.xpose.msra.mxu0 %v44
    %48 = vmatprep.subr.mxu0 0.0
    %49 = vmatpush1.xpose.msra.mxu0 0.0
    %50 = vmatprep.subr.mxu0 0.0
    %51 = vmatpush1.xpose.msra.mxu0 0.0
    %52 = vmatprep.subr.mxu0 0.0
    %53 = vmatpush1.xpose.msra.mxu0 0.0
    %54 = vmatprep.subr.mxu0 0.0
    %55 = vmatpush1.xpose.msra.mxu0 0.0
    %56 = vmatprep.subr.mxu0 0.0
    %57 = vmatpush1.xpose.msra.mxu0 0.0
    %58 = vmatprep.subr.mxu0 0.0
    %59 = vmatpush1.xpose.msra.mxu0 0.0
    %60 = vmatprep.subr.mxu0 0.0
    %61 = vmatpush1.xpose.msra.mxu0 0.0
    %62 = vmatprep.subr.mxu0 0.0
    %63 = vmatpush1.xpose.msra.mxu0 0.0
    %64 = vmatprep.subr.mxu0 0.0
    %65 = vmatpush1.xpose.msra.mxu0 0.0
    %66 = vmatprep.subr.mxu0 0.0
    %67 = vmatpush1.xpose.msra.mxu0 0.0
    %68 = vmatprep.subr.mxu0 0.0
    %69 = vmatpush1.xpose.msra.mxu0 0.0
    %70 = vmatprep.subr.mxu0 0.0
    %71 = vmatpush1.xpose.msra.mxu0 0.0
    %72 = vmatprep.subr.mxu0 0.0
    %73 = vmatpush1.xpose.msra.mxu0 0.0
    %74 = vmatprep.subr.mxu0 0.0
    %75 = vmatpush1.xpose.msra.mxu0 0.0
    %76 = vmatprep.subr.mxu0 0.0
    %77 = vmatpush1.xpose.msra.mxu0 0.0
    %78 = vmatprep.subr.mxu0 0.0
    %79 = vmatpush1.xpose.msra.mxu0 0.0
    %80 = vmatprep.subr.mxu0 0.0
    %81 = vmatpush1.xpose.msra.mxu0 0.0
    %82 = vmatprep.subr.mxu0 0.0
    %83 = vmatpush1.xpose.msra.mxu0 0.0
    %84 = vmatprep.subr.mxu0 0.0
    %85 = vmatpush1.xpose.msra.mxu0 0.0
    %86 = vmatprep.subr.mxu0 0.0
    %87 = vmatpush1.xpose.msra.mxu0 0.0
    %88 = vmatprep.subr.mxu0 0.0
    %89 = vmatpush1.xpose.msra.mxu0 0.0
    %90 = vmatprep.subr.mxu0 0.0
    %91 = vmatpush1.xpose.msra.mxu0 0.0
    %92 = vmatprep.subr.mxu0 0.0
    %93 = vmatpush1.xpose.msra.mxu0 0.0
    %94 = vmatprep.subr.mxu0 0.0
    %95 = vmatpush1.xpose.msra.mxu0 0.0
    %96 = vmatprep.subr.mxu0 0.0
    %97 = vmatpush1.xpose.msra.mxu0 0.0
    %98 = vmatprep.subr.mxu0 0.0
    %99 = vmatpush1.xpose.msra.mxu0 0.0
    %100 = vmatprep.subr.mxu0 0.0
    %101 = vmatpush1.xpose.msra.mxu0 0.0
    %102 = vmatprep.subr.mxu0 0.0
    %103 = vmatpush1.xpose.msra.mxu0 0.0
    %104 = vmatprep.subr.mxu0 0.0
    %105 = vmatpush1.xpose.msra.mxu0 0.0
    %106 = vmatprep.subr.mxu0 0.0
    %107 = vmatpush1.xpose.msra.mxu0 0.0
    %108 = vmatprep.subr.mxu0 0.0
    %109 = vmatpush1.xpose.msra.mxu0 0.0
    %110 = vmatprep.mubr.f32.mxu0 0.0
    %111 = vmatmul.mubr.f32.gmra.mrb[0].mxu0 %v38
    %v112 = vpop.f32.mrb[0].mxu0
    %v113 = vadd.f32 %v29, %v112
    %v114 = vpop.f32.mrb[0].mxu0
    %115 = vmatprep.mubr.f32.mxu0 0.0
    %116 = vmatmul.mubr.f32.gmra.mrb[0].mxu0 %v41
    %v117 = vpop.f32.mrb[0].mxu0
    %v118 = vadd.f32 %v34, %v117
    %v119 = vpop.f32.mrb[0].mxu0
    %120 = vdwg.mxu0
    %v121 = vtanh.pop %v113
    %v122 = vtanh.pop %v118
    %v123 = vld [vmem:[%s3] sm:$0x3]
    %v124 = vld [vmem:[%s4] sm:$0x3]
    %126 = vset.pattern.permute.xlu0 0
    %127 = vperm.xlu0 %126, %v124
    %v128 = vpop.permute.xlu0 %127
    %vm130 = vcmask 80896
    %v132 = vsel %vm130, %v123, 0
    %vm134 = vcmask 1041408
    %v136 = vsel %vm134, %v122, 0
    %138 = vmatprep.subr.mxu0 0.0
    %139 = vmatpush1.msra.mxu0 %v121
    %140 = vmatprep.subr.mxu0 0.0
    %141 = vmatpush1.msra.mxu0 %v136
    %142 = vmatprep.subr.mxu0 0.0
    %143 = vmatpush1.msra.mxu0 0.0
    %144 = vmatprep.subr.mxu0 0.0
    %145 = vmatpush1.msra.mxu0 0.0
    %146 = vmatprep.subr.mxu0 0.0
    %147 = vmatpush1.msra.mxu0 0.0
    %148 = vmatprep.subr.mxu0 0.0
    %149 = vmatpush1.msra.mxu0 0.0
    %150 = vmatprep.subr.mxu0 0.0
    %151 = vmatpush1.msra.mxu0 0.0
    %152 = vmatprep.subr.mxu0 0.0
    %153 = vmatpush1.msra.mxu0 0.0
    %154 = vmatprep.subr.mxu0 0.0
    %155 = vmatpush1.msra.mxu0 0.0
    %156 = vmatprep.subr.mxu0 0.0
    %157 = vmatpush1.msra.mxu0 0.0
    %158 = vmatprep.subr.mxu0 0.0
    %159 = vmatpush1.msra.mxu0 0.0
    %160 = vmatprep.subr.mxu0 0.0
    %161 = vmatpush1.msra.mxu0 0.0
    %162 = vmatprep.subr.mxu0 0.0
    %163 = vmatpush1.msra.mxu0 0.0
    %164 = vmatprep.subr.mxu0 0.0
    %165 = vmatpush1.msra.mxu0 0.0
    %166 = vmatprep.subr.mxu0 0.0
    %167 = vmatpush1.msra.mxu0 0.0
    %168 = vmatprep.subr.mxu0 0.0
    %169 = vmatpush1.msra.mxu0 0.0
    %170 = vmatprep.subr.mxu0 0.0
    %171 = vmatpush1.msra.mxu0 0.0
    %172 = vmatprep.subr.mxu0 0.0
    %173 = vmatpush1.msra.mxu0 0.0
    %174 = vmatprep.subr.mxu0 0.0
    %175 = vmatpush1.msra.mxu0 0.0
    %176 = vmatprep.subr.mxu0 0.0
    %177 = vmatpush1.msra.mxu0 0.0
    %178 = vmatprep.subr.mxu0 0.0
    %179 = vmatpush1.msra.mxu0 0.0
    %180 = vmatprep.subr.mxu0 0.0
    %181 = vmatpush1.msra.mxu0 0.0
    %182 = vmatprep.subr.mxu0 0.0
    %183 = vmatpush1.msra.mxu0 0.0
    %184 = vmatprep.subr.mxu0 0.0
    %185 = vmatpush1.msra.mxu0 0.0
    %186 = vmatprep.subr.mxu0 0.0
    %187 = vmatpush1.msra.mxu0 0.0
    %188 = vmatprep.subr.mxu0 0.0
    %189 = vmatpush1.msra.mxu0 0.0
    %190 = vmatprep.subr.mxu0 0.0
    %191 = vmatpush1.msra.mxu0 0.0
    %192 = vmatprep.subr.mxu0 0.0
    %193 = vmatpush1.msra.mxu0 0.0
    %194 = vmatprep.subr.mxu0 0.0
    %195 = vmatpush1.msra.mxu0 0.0
    %196 = vmatprep.subr.mxu0 0.0
    %197 = vmatpush1.msra.mxu0 0.0
    %198 = vmatprep.subr.mxu0 0.0
    %199 = vmatpush1.msra.mxu0 0.0
    %200 = vmatprep.subr.mxu0 0.0
    %201 = vmatpush1.msra.mxu0 0.0
    %202 = vmatprep.mubr.f32.mxu0 0.0
    %203 = vmatmul.mubr.f32.gmra.mrb[0].mxu0 %v132
    %v204 = vpop.f32.mrb[0].mxu0
    %v205 = vadd.f32 %v128, %v204
    %v206 = vpop.f32.mrb[0].mxu0
    %207 = vdwg.mxu0
    %v209 = vrot.slane %v205, 1
    %v211 = vsub.f32 %v205, %v209
    %v212 = vand.u32 2147483647, %v211
    %v213 = vsub.f32 0.0, %v212
    %v214 = vmul.f32 %v213, 1.442695
    %v215 = vpow.pop %v214
    %v216 = vadd.f32 %v215, 1.0
    %v217 = vlog2.pop %v216
    %v218 = vmul.f32 %v217, 0.6931472
    %v219 = vsub.f32 0.0, %v211
    %v220 = vmax.f32 %v219, 0.0
    %v221 = vadd.f32 %v220, %v218
    %v222 = vsub.f32 0.0, %v221
    %vm223 = vcmask 57344
    %224 = vst.msk [vmem:[#allocation2] sm:$0x1] %vm223, %v222
    %v225 = vmax.f32 %v211, 0.0
    %v226 = vadd.f32 %v225, %v218
    %v227 = vsub.f32 0.0, %v226
    %228 = vst.msk [vmem:[#allocation2 + $0x1] sm:$0x1] %vm223, %v227
    // Predicated region
    $region22: #{tpu_custom_call.1} parent=1 // pred_check
      _
    $region23: #{tpu_custom_call.1} parent=1 // pred_check_branch
      %230 = sbr.rel (0) target = $region25
    $region24: #{tpu_custom_call.1} parent=1 // pred_region
      %s232 = ssub.s32 32, 32
      %233 = vsyncadd [#allocation3], %s232
      %s235 = sshll.u32 [#allocation2], 4
      %s236 = int_to_ptr.vmem [resolvable:$true] %s235
      %238 = dma.vmem_to_hbm [thread:$0]  %s236, 32, %s5, [#allocation3]
    $region25: #{tpu_custom_call.1} parent=1 // pred_fallthru
      _
    // Predicated region
    $region26: #{tpu_custom_call.1} parent=1 // pred_check
      _
    $region27: #{tpu_custom_call.1} parent=1 // pred_check_branch
      %240 = sbr.rel (0) target = $region29
    $region28: #{tpu_custom_call.1} parent=1 // pred_region
      %241 = dma.done [#allocation3], 32
    $region29: #{tpu_custom_call.1} parent=1 // pred_fallthru
      _
    %242 = vsyncpa [#allocation3], 1

</llo_original>
